<compile_context>
chip_gen: v7x
topology: tpu7x:2x2x1
jax: 0.10.0
libtpu: 0.0.40
codegen_flags: <defaults>
</compile_context>

<pallas_src>
import functools

import jax
import jax.numpy as jnp
from jax.experimental import pallas as pl
from jax.experimental.pallas import tpu as pltpu

_LANE = 128
_SUBLANE = 8


def _round_up(x, m):
    return ((x + m - 1) // m) * m


# ---------------------------------------------------------------------------
# Kernel
# ---------------------------------------------------------------------------
def _attn_gru_kernel(fact_ref, h_ref, g_ref,
                     wx_ref, bx_ref, uh_ref, bu_ref,
                     out_ref):
    Hp = out_ref.shape[-1]                      # padded hidden width (lane-dense)
    w_dtype = wx_ref.dtype                      # bf16 (default) or f32

    h = h_ref[...]                              # (TB, Hp) f32 -- kept f32 for blend
    g = g_ref[...]                              # (TB, 1)  f32

    # Explicit low-precision cast of MXU inputs (do NOT rely on promotion:
    # jnp.dot(f32, bf16) would upcast the weights back to f32).
    fact_lo = fact_ref[...].astype(w_dtype)     # (TB, Dp)
    h_lo = h.astype(w_dtype)                    # (TB, Hp)

    # Two fused MXU matmuls (weights concatenated along the output axis).
    #   xw[:, :Hp] = Wr(fact) + (Wr_b + Ur_b),  xw[:, Hp:] = W(fact) + W_b
    #   hu[:, :Hp] = hi_1 @ Ur.T,               hu[:, Hp:] = hi_1 @ U.T
    xw = jnp.dot(fact_lo, wx_ref[...], preferred_element_type=jnp.float32) + bx_ref[...]
    hu = jnp.dot(h_lo, uh_ref[...], preferred_element_type=jnp.float32)

    # sigmoid(x) = 0.5 * (tanh(x/2) + 1): one EUP push instead of exp + divide.
    r_pre = xw[:, :Hp] + hu[:, :Hp]
    r_i = 0.5 * (jnp.tanh(0.5 * r_pre) + 1.0)                           # (TB, Hp)
    h_tilda = jnp.tanh(xw[:, Hp:] + r_i * (hu[:, Hp:] + bu_ref[...]))   # (TB, Hp)

    # g*h_tilda + (1-g)*h  ==  h + g*(h_tilda - h)   (3 VPU ops, no (1-g))
    out_ref[...] = h + g * (h_tilda - h)


# ---------------------------------------------------------------------------
# One-time parameter packing (hoisted out of the per-call / per-timestep path)
# ---------------------------------------------------------------------------
def prepare_params(params, weight_dtype=jnp.bfloat16):
    """Transpose, pad H and Din to multiples of 128, concat along the out axis.

    Call once at parameter-load time.  bf16 weights (default) halve HBM/VMEM
    weight traffic; MXU still accumulates in f32.  Returns a dict of ARRAYS
    only (no Python ints) so it can be passed straight through jit.
    """
    H = params["Ur_w"].shape[0]
    Din = params["Wr_w"].shape[1]
    Hp = _round_up(H, _LANE)
    Dp = _round_up(Din, _LANE)
    ph, pd = Hp - H, Dp - Din
    f32 = jnp.float32

    # fact-path weights: (Dp, 2*Hp) = [Wr.T | W.T], rows+cols zero-padded.
    wr_t = jnp.pad(params["Wr_w"].T.astype(f32), ((0, pd), (0, ph)))
    w_t = jnp.pad(params["W_w"].T.astype(f32), ((0, pd), (0, ph)))
    wx = jnp.concatenate([wr_t, w_t], axis=1)

    # hidden-path weights: (Hp, 2*Hp) = [Ur.T | U.T], rows+cols zero-padded.
    ur_t = jnp.pad(params["Ur_w"].T.astype(f32), ((0, ph), (0, ph)))
    u_t = jnp.pad(params["U_w"].T.astype(f32), ((0, ph), (0, ph)))
    uh = jnp.concatenate([ur_t, u_t], axis=1)

    # Biases (f32): Ur_b folded into the fact-path r-section; U_b must stay
    # inside the r-gate as the math requires.
    bx = jnp.concatenate([
        jnp.pad((params["Wr_b"] + params["Ur_b"]).astype(f32), (0, ph)),
        jnp.pad(params["W_b"].astype(f32), (0, ph)),
    ]).reshape(1, 2 * Hp)
    bu = jnp.pad(params["U_b"].astype(f32), (0, ph)).reshape(1, Hp)

    return {"wx": wx.astype(weight_dtype), "uh": uh.astype(weight_dtype),
            "bx": bx, "bu": bu}


# ---------------------------------------------------------------------------
# Padded-layout core (no pad/slice HBM copies): use this directly inside a
# sequence loop, keeping h in (Bp, Hp) layout between steps.
# ---------------------------------------------------------------------------
def _resident_spec(shape):
    """Grid-invariant operand: resident in VMEM, single-buffered if supported."""
    idx = lambda i: (0, 0)
    try:
        return pl.BlockSpec(shape, idx, pipeline_mode=pl.Buffered(1))
    except (TypeError, AttributeError):
        return pl.BlockSpec(shape, idx)


def attn_gru_cell_padded(fact_p, h_p, g_p, prepared, *, batch_tile):
    """fact_p: (Bp, Dp), h_p: (Bp, Hp), g_p: (Bp, 1) -> (Bp, Hp), all padded."""
    wx, bx, uh, bu = prepared["wx"], prepared["bx"], prepared["uh"], prepared["bu"]
    Bp, Dp = fact_p.shape
    Hp = h_p.shape[1]
    TB = batch_tile

    # VMEM budget computed from actual sizes (weights once + double-buffered
    # activation tiles + intermediates + margin), not a hard-coded constant.
    wbytes = jnp.dtype(wx.dtype).itemsize
    weight_bytes = (Dp * 2 * Hp + Hp * 2 * Hp) * wbytes + 3 * Hp * 4
    act_bytes = 2 * TB * (Dp + 2 * Hp + 1) * 4          # fact + h + out + g, x2 buffers
    interm_bytes = 2 * TB * 2 * Hp * 4                  # xw / hu intermediates
    vmem_limit = int(min(max(weight_bytes + act_bytes + interm_bytes + (4 << 20),
                             16 << 20), 100 << 20))

    grid = (Bp // TB,)
    return pl.pallas_call(
        _attn_gru_kernel,
        out_shape=jax.ShapeDtypeStruct((Bp, Hp), jnp.float32),
        grid_spec=pltpu.PrefetchScalarGridSpec(
            num_scalar_prefetch=0,
            grid=grid,
            in_specs=[
                pl.BlockSpec((TB, Dp), lambda i: (i, 0)),   # fact tile
                pl.BlockSpec((TB, Hp), lambda i: (i, 0)),   # h tile
                pl.BlockSpec((TB, 1), lambda i: (i, 0)),    # g tile
                _resident_spec((Dp, 2 * Hp)),               # [Wr.T | W.T]
                _resident_spec((1, 2 * Hp)),                # fused fact-path bias
                _resident_spec((Hp, 2 * Hp)),               # [Ur.T | U.T]
                _resident_spec((1, Hp)),                    # U bias
            ],
            out_specs=pl.BlockSpec((TB, Hp), lambda i: (i, 0)),
        ),
        compiler_params=pltpu.CompilerParams(
            dimension_semantics=("parallel",),      # batch tiles shard across TCs
            vmem_limit_bytes=vmem_limit,
        ),
    )(fact_p, h_p, g_p, wx, bx, uh, bu)


# ---------------------------------------------------------------------------
# Convenience wrapper (pads once, slices once)
# ---------------------------------------------------------------------------
@functools.partial(jax.jit, static_argnames=("max_batch_tile",))
def attn_gru_cell(fact, hi_1, g, prepared, *, max_batch_tile=256):
    """fact: (B, Din), hi_1: (B, H), g: (B,)  ->  hi: (B, H)."""
    B, Din = fact.shape
    H = hi_1.shape[1]                      # static (from shape), not a traced value
    Dp = prepared["wx"].shape[0]           # static padded sizes from packed weights
    Hp = prepared["uh"].shape[0]

    # Batch tile: multiple of 8 sublanes; >=2 tiles whenever B >= 16 so both
    # v7x TensorCores get work; capped so very large batches still pipeline.
    if B >= 2 * max_batch_tile:
        TB = max_batch_tile
    elif B >= 2 * _SUBLANE:
        TB = _round_up(-(-B // 2), _SUBLANE)
    else:
        TB = _round_up(B, _SUBLANE)
    Bp = _round_up(B, TB)

    f32 = jnp.float32
    fact_p = jnp.pad(fact.astype(f32), ((0, Bp - B), (0, Dp - Din)))
    h_p = jnp.pad(hi_1.astype(f32), ((0, Bp - B), (0, Hp - H)))
    g_p = jnp.pad(g.astype(f32).reshape(B, 1), ((0, Bp - B), (0, 0)))

    out = attn_gru_cell_padded(fact_p, h_p, g_p, prepared, batch_tile=TB)
    return out[:B, :H]


# ---------------------------------------------------------------------------
# Init + pure-JAX reference (mirrors the PyTorch module)
# ---------------------------------------------------------------------------
def _xavier_normal(key, out_f, in_f):
    std = (2.0 / (in_f + out_f)) ** 0.5
    return std * jax.random.normal(key, (out_f, in_f), dtype=jnp.float32)


def init_params(key, input_size, hidden_size):
    ks = jax.random.split(key, 8)
    bound_in = 1.0 / (input_size ** 0.5)
    bound_h = 1.0 / (hidden_size ** 0.5)
    return {
        "Wr_w": _xavier_normal(ks[0], hidden_size, input_size),
        "Wr_b": jax.random.uniform(ks[1], (hidden_size,), jnp.float32, -bound_in, bound_in),
        "Ur_w": _xavier_normal(ks[2], hidden_size, hidden_size),
        "Ur_b": jax.random.uniform(ks[3], (hidden_size,), jnp.float32, -bound_h, bound_h),
        "W_w": _xavier_normal(ks[4], hidden_size, input_size),
        "W_b": jax.random.uniform(ks[5], (hidden_size,), jnp.float32, -bound_in, bound_in),
        "U_w": _xavier_normal(ks[6], hidden_size, hidden_size),
        "U_b": jax.random.uniform(ks[7], (hidden_size,), jnp.float32, -bound_h, bound_h),
    }


def _reference(fact, hi_1, g, p):
    r_i = jax.nn.sigmoid(fact @ p["Wr_w"].T + p["Wr_b"] + hi_1 @ p["Ur_w"].T + p["Ur_b"])
    h_tilda = jnp.tanh(fact @ p["W_w"].T + p["W_b"] + r_i * (hi_1 @ p["U_w"].T + p["U_b"]))
    return g[:, None] * h_tilda + (1.0 - g[:, None]) * hi_1


if __name__ == "__main__":
    key = jax.random.PRNGKey(0)
    k_param, k_fact, k_h, k_g = jax.random.split(key, 4)

    batch = 8
    input_size = 32
    hidden_size = 32

    params = init_params(k_param, input_size, hidden_size)
    prepared = prepare_params(params)   # one-time packing (bf16 weights by default)

    fact = jax.random.normal(k_fact, (batch, input_size), dtype=jnp.float32)
    hi_1 = jax.random.normal(k_h, (batch, hidden_size), dtype=jnp.float32)
    g = jax.random.uniform(k_g, (batch,), dtype=jnp.float32)   # attention gate

    hi = attn_gru_cell(fact, hi_1, g, prepared)
    hi = jax.block_until_ready(hi)

    ref = _reference(fact, hi_1, g, params)
    assert hi.shape == (batch, hidden_size)
    max_err = float(jnp.max(jnp.abs(hi - ref)))
    assert max_err < 3e-2, f"mismatch vs reference: max abs err {max_err}"

    print("KERNEL_OK")
</pallas_src>

<mosaic_0001>
module attributes {stable_mosaic.version = 11 : i64} {
  func.func @_attn_gru_kernel(%arg0: i32, %arg1: memref<8x128xf32, #tpu.memory_space<vmem>>, %arg2: memref<8x128xf32, #tpu.memory_space<vmem>>, %arg3: memref<8x1xf32, #tpu.memory_space<vmem>>, %arg4: memref<128x256xbf16, #tpu.memory_space<vmem>>, %arg5: memref<1x256xf32, #tpu.memory_space<vmem>>, %arg6: memref<128x256xbf16, #tpu.memory_space<vmem>>, %arg7: memref<1x128xf32, #tpu.memory_space<vmem>>, %arg8: memref<8x128xf32, #tpu.memory_space<vmem>>) attributes {dimension_semantics = [#tpu.dimension_semantics<parallel>], iteration_bounds = array<i64: 1>, scalar_prefetch = 0 : i64, scratch_operands = 0 : i64, tpu.core_type = #tpu.core_type<tc>, window_params = [{transform_indices = @transform_0, window_bounds = array<i64: 8, 128>}, {transform_indices = @transform_1, window_bounds = array<i64: 8, 128>}, {transform_indices = @transform_2, window_bounds = array<i64: 8, 1>}, {pipeline_mode = #tpu.pipeline_mode<synchronous>, transform_indices = @transform_3, window_bounds = array<i64: 128, 256>}, {pipeline_mode = #tpu.pipeline_mode<synchronous>, transform_indices = @transform_4, window_bounds = array<i64: 1, 256>}, {pipeline_mode = #tpu.pipeline_mode<synchronous>, transform_indices = @transform_5, window_bounds = array<i64: 128, 256>}, {pipeline_mode = #tpu.pipeline_mode<synchronous>, transform_indices = @transform_6, window_bounds = array<i64: 1, 128>}, {transform_indices = @transform_7, window_bounds = array<i64: 8, 128>}]} {
    %c0 = arith.constant 0 : index
    %c0_0 = arith.constant 0 : index
    %0 = vector.load %arg2[%c0, %c0_0] : memref<8x128xf32, #tpu.memory_space<vmem>>, vector<8x128xf32>
    %c0_1 = arith.constant 0 : index
    %c0_2 = arith.constant 0 : index
    %1 = vector.load %arg3[%c0_1, %c0_2] : memref<8x1xf32, #tpu.memory_space<vmem>>, vector<8x1xf32>
    %c0_3 = arith.constant 0 : index
    %c0_4 = arith.constant 0 : index
    %2 = vector.load %arg1[%c0_3, %c0_4] : memref<8x128xf32, #tpu.memory_space<vmem>>, vector<8x128xf32>
    %3 = arith.truncf %2 : vector<8x128xf32> to vector<8x128xbf16>
    %4 = arith.truncf %0 : vector<8x128xf32> to vector<8x128xbf16>
    %c0_5 = arith.constant 0 : index
    %c0_6 = arith.constant 0 : index
    %5 = vector.load %arg4[%c0_5, %c0_6] : memref<128x256xbf16, #tpu.memory_space<vmem>>, vector<128x256xbf16>
    %cst = arith.constant dense<0.000000e+00> : vector<8x256xf32>
    %6 = tpu.matmul %3, %5, %cst {dimension_numbers = #tpu.dot_dimension_numbers<[1], [0], [0], [1], [0, 0, 1, 1], [], []>} : vector<8x128xbf16>, vector<128x256xbf16>, vector<8x256xf32> -> vector<8x256xf32>
    %c0_7 = arith.constant 0 : index
    %c0_8 = arith.constant 0 : index
    %7 = vector.load %arg5[%c0_7, %c0_8] : memref<1x256xf32, #tpu.memory_space<vmem>>, vector<1x256xf32>
    %8 = vector.broadcast %7 : vector<1x256xf32> to vector<8x256xf32>
    %9 = arith.addf %6, %8 : vector<8x256xf32>
    %c0_9 = arith.constant 0 : index
    %c0_10 = arith.constant 0 : index
    %10 = vector.load %arg6[%c0_9, %c0_10] : memref<128x256xbf16, #tpu.memory_space<vmem>>, vector<128x256xbf16>
    %cst_11 = arith.constant dense<0.000000e+00> : vector<8x256xf32>
    %11 = tpu.matmul %4, %10, %cst_11 {dimension_numbers = #tpu.dot_dimension_numbers<[1], [0], [0], [1], [0, 0, 1, 1], [], []>} : vector<8x128xbf16>, vector<128x256xbf16>, vector<8x256xf32> -> vector<8x256xf32>
    %12 = vector.extract_strided_slice %9 {offsets = [0, 0], sizes = [8, 128], strides = [1, 1]} : vector<8x256xf32> to vector<8x128xf32>
    %13 = vector.extract_strided_slice %11 {offsets = [0, 0], sizes = [8, 128], strides = [1, 1]} : vector<8x256xf32> to vector<8x128xf32>
    %14 = arith.addf %12, %13 : vector<8x128xf32>
    %cst_12 = arith.constant 5.000000e-01 : f32
    %15 = vector.broadcast %cst_12 : f32 to vector<8x128xf32>
    %16 = arith.mulf %15, %14 : vector<8x128xf32>
    %17 = math.tanh %16 : vector<8x128xf32>
    %cst_13 = arith.constant 1.000000e+00 : f32
    %18 = vector.broadcast %cst_13 : f32 to vector<8x128xf32>
    %19 = arith.addf %17, %18 : vector<8x128xf32>
    %cst_14 = arith.constant 5.000000e-01 : f32
    %20 = vector.broadcast %cst_14 : f32 to vector<8x128xf32>
    %21 = arith.mulf %20, %19 : vector<8x128xf32>
    %22 = vector.extract_strided_slice %9 {offsets = [0, 128], sizes = [8, 128], strides = [1, 1]} : vector<8x256xf32> to vector<8x128xf32>
    %23 = vector.extract_strided_slice %11 {offsets = [0, 128], sizes = [8, 128], strides = [1, 1]} : vector<8x256xf32> to vector<8x128xf32>
    %c0_15 = arith.constant 0 : index
    %c0_16 = arith.constant 0 : index
    %24 = vector.load %arg7[%c0_15, %c0_16] : memref<1x128xf32, #tpu.memory_space<vmem>>, vector<1x128xf32>
    %25 = vector.broadcast %24 : vector<1x128xf32> to vector<8x128xf32>
    %26 = arith.addf %23, %25 : vector<8x128xf32>
    %27 = arith.mulf %21, %26 : vector<8x128xf32>
    %28 = arith.addf %22, %27 : vector<8x128xf32>
    %29 = math.tanh %28 : vector<8x128xf32>
    %30 = arith.subf %29, %0 : vector<8x128xf32>
    %31 = vector.broadcast %1 : vector<8x1xf32> to vector<8x128xf32>
    %32 = arith.mulf %31, %30 : vector<8x128xf32>
    %33 = arith.addf %0, %32 : vector<8x128xf32>
    %c0_17 = arith.constant 0 : index
    %c0_18 = arith.constant 0 : index
    %34 = vector.load %arg8[%c0_17, %c0_18] : memref<8x128xf32, #tpu.memory_space<vmem>>, vector<8x128xf32>
    tpu.vector_store %arg8[%c0_17, %c0_18], %33 {strides = array<i32>} : memref<8x128xf32, #tpu.memory_space<vmem>>, vector<8x128xf32>,
    return
  }
  func.func @transform_0(%arg0: i32) -> (i32, i32) {
    %c0_i32 = arith.constant 0 : i32
    %c0_i32_0 = arith.constant 0 : i32
    return %arg0, %c0_i32 : i32, i32
  }
  func.func @transform_1(%arg0: i32) -> (i32, i32) {
    %c0_i32 = arith.constant 0 : i32
    %c0_i32_0 = arith.constant 0 : i32
    return %arg0, %c0_i32 : i32, i32
  }
  func.func @transform_2(%arg0: i32) -> (i32, i32) {
    %c0_i32 = arith.constant 0 : i32
    %c0_i32_0 = arith.constant 0 : i32
    return %arg0, %c0_i32 : i32, i32
  }
  func.func @transform_3(%arg0: i32) -> (i32, i32) {
    %c0_i32 = arith.constant 0 : i32
    %c0_i32_0 = arith.constant 0 : i32
    %c0_i32_1 = arith.constant 0 : i32
    return %c0_i32, %c0_i32_0 : i32, i32
  }
  func.func @transform_4(%arg0: i32) -> (i32, i32) {
    %c0_i32 = arith.constant 0 : i32
    %c0_i32_0 = arith.constant 0 : i32
    %c0_i32_1 = arith.constant 0 : i32
    return %c0_i32, %c0_i32_0 : i32, i32
  }
  func.func @transform_5(%arg0: i32) -> (i32, i32) {
    %c0_i32 = arith.constant 0 : i32
    %c0_i32_0 = arith.constant 0 : i32
    %c0_i32_1 = arith.constant 0 : i32
    return %c0_i32, %c0_i32_0 : i32, i32
  }
  func.func @transform_6(%arg0: i32) -> (i32, i32) {
    %c0_i32 = arith.constant 0 : i32
    %c0_i32_0 = arith.constant 0 : i32
    %c0_i32_1 = arith.constant 0 : i32
    return %c0_i32, %c0_i32_0 : i32, i32
  }
  func.func @transform_7(%arg0: i32) -> (i32, i32) {
    %c0_i32 = arith.constant 0 : i32
    %c0_i32_0 = arith.constant 0 : i32
    return %arg0, %c0_i32 : i32, i32
  }
}

</mosaic_0001>

<llo_original>
// kernel: attn_gru_cell.1
$region0: #{attn_gru_cell.1}
  #allocation0 [shape = 'u32[]', space=smem, size = 0x4, offset = 0x4, fixed_abs, tag = 'smem constant byte address 0x4 - core index']
  #allocation1 [shape = 'u32[144,128]{1,0:T(1,128)}', space=vmem, size = 0x12000, scoped, tag = 'internal scratch']
  %s0 = inlined_call_operand.vmem [shape: f32[8,128], index: 0, kind: input, shape index: {}]
  %s1 = inlined_call_operand.vmem [shape: f32[8,128], index: 1, kind: input, shape index: {}]
  %s2 = inlined_call_operand.vmem [shape: f32[8,1], index: 2, kind: input, shape index: {}]
  %s3 = inlined_call_operand.hbm [shape: bf16[128,256], index: 3, kind: input, shape index: {}]
  %s4 = inlined_call_operand.vmem [shape: f32[1,256], index: 4, kind: input, shape index: {}]
  %s5 = inlined_call_operand.hbm [shape: bf16[128,256], index: 5, kind: input, shape index: {}]
  %s6 = inlined_call_operand.vmem [shape: f32[1,128], index: 6, kind: input, shape index: {}]
  %s7 = inlined_call_operand.hbm [shape: f32[8,128], index: 7, kind: output, shape index: {}]
  %s8 = sld [smem:[#allocation0]]
  $region46: #{attn_gru_cell.1} parent=0
    _
  %s10 = ssub.s32 1, %s8
  %s11 = scalar_select 0, %s10, %s8
  $region1: #{attn_gru_cell.1} parent=0
    #allocation2 [shape = 'u8[65536]{0}', space=vmem, size = 0x10000, scoped, tag = 'input window, operand 3, single buffered']
    #allocation3 [shape = 's32[1]{0}', space=sflag, size = 0x4, scoped, tag = 'scoped memory for attn_gru_cell.1']
    #allocation4 [shape = 's32[1]{0}', space=sflag, size = 0x4, scoped, tag = 'scoped memory for attn_gru_cell.1']
    #allocation5 [shape = 'u8[65536]{0}', space=vmem, size = 0x10000, scoped, tag = 'input window, operand 5, single buffered']
    #allocation6 [shape = 's32[1]{0}', space=sflag, size = 0x4, scoped, tag = 'scoped memory for attn_gru_cell.1']
    #allocation7 [shape = 'u8[4096]{0}', space=vmem, size = 0x1000, scoped, tag = 'output window, operand 0, single buffered']
    %12 = vsyncpa [#allocation3], 0
    %13 = vsyncpa [#allocation6], 0
    %14 = vsyncpa [#allocation4], 0
    // Predicated region
    $region2: #{attn_gru_cell.1} parent=1 // pred_check
      _
    $region3: #{attn_gru_cell.1} parent=1 // pred_check_branch
      %16 = sbr.rel (0) target = $region5
    $region4: #{attn_gru_cell.1} parent=1 // pred_region
      _
    $region5: #{attn_gru_cell.1} parent=1 // pred_fallthru
      _
    // Predicated region
    $region6: #{attn_gru_cell.1} parent=1 // pred_check
      _
    $region7: #{attn_gru_cell.1} parent=1 // pred_check_branch
      %18 = sbr.rel (0) target = $region9
    $region8: #{attn_gru_cell.1} parent=1 // pred_region
      _
    $region9: #{attn_gru_cell.1} parent=1 // pred_fallthru
      _
    // Predicated region
    $region10: #{attn_gru_cell.1} parent=1 // pred_check
      _
    $region11: #{attn_gru_cell.1} parent=1 // pred_check_branch
      %20 = sbr.rel (0) target = $region13
    $region12: #{attn_gru_cell.1} parent=1 // pred_region
      _
    $region13: #{attn_gru_cell.1} parent=1 // pred_fallthru
      _
    // Predicated region
    $region14: #{attn_gru_cell.1} parent=1 // pred_check
      _
    $region15: #{attn_gru_cell.1} parent=1 // pred_check_branch
      %22 = sbr.rel (0) target = $region17
    $region16: #{attn_gru_cell.1} parent=1 // pred_region
      %s24 = ssub.s32 2048, 2048
      %25 = vsyncadd [#allocation3], %s24
      %s26 = sshll.u32 [#allocation2], 4
      %s27 = int_to_ptr.vmem [resolvable:$true] %s26
      %32 = dma.hbm_to_vmem [thread:$0]  %s3, 2048, %s27, [#allocation3], 128, 128, 8
    $region17: #{attn_gru_cell.1} parent=1 // pred_fallthru
      _
    // Predicated region
    $region18: #{attn_gru_cell.1} parent=1 // pred_check
      _
    $region19: #{attn_gru_cell.1} parent=1 // pred_check_branch
      %34 = sbr.rel (0) target = $region21
    $region20: #{attn_gru_cell.1} parent=1 // pred_region
      _
    $region21: #{attn_gru_cell.1} parent=1 // pred_fallthru
      _
    // Predicated region
    $region22: #{attn_gru_cell.1} parent=1 // pred_check
      _
    $region23: #{attn_gru_cell.1} parent=1 // pred_check_branch
      %36 = sbr.rel (0) target = $region25
    $region24: #{attn_gru_cell.1} parent=1 // pred_region
      %s38 = ssub.s32 2048, 2048
      %39 = vsyncadd [#allocation6], %s38
      %s40 = sshll.u32 [#allocation5], 4
      %s41 = int_to_ptr.vmem [resolvable:$true] %s40
      %46 = dma.hbm_to_vmem [thread:$0]  %s5, 2048, %s41, [#allocation6], 128, 128, 8
    $region25: #{attn_gru_cell.1} parent=1 // pred_fallthru
      _
    // Predicated region
    $region26: #{attn_gru_cell.1} parent=1 // pred_check
      _
    $region27: #{attn_gru_cell.1} parent=1 // pred_check_branch
      %48 = sbr.rel (0) target = $region29
    $region28: #{attn_gru_cell.1} parent=1 // pred_region
      _
    $region29: #{attn_gru_cell.1} parent=1 // pred_fallthru
      _
    // Predicated region
    $region30: #{attn_gru_cell.1} parent=1 // pred_check
      _
    $region31: #{attn_gru_cell.1} parent=1 // pred_check_branch
      %50 = sbr.rel (0) target = $region33
    $region32: #{attn_gru_cell.1} parent=1 // pred_region
      %51 = dma.done [#allocation3], 2048
    $region33: #{attn_gru_cell.1} parent=1 // pred_fallthru
      _
    // Predicated region
    $region34: #{attn_gru_cell.1} parent=1 // pred_check
      _
    $region35: #{attn_gru_cell.1} parent=1 // pred_check_branch
      %53 = sbr.rel (0) target = $region37
    $region36: #{attn_gru_cell.1} parent=1 // pred_region
      %54 = dma.done [#allocation6], 2048
    $region37: #{attn_gru_cell.1} parent=1 // pred_fallthru
      _
    %v56 = vld [vmem:[%s1] sm:$0xff]
    %v57 = vld [vmem:[%s2] sm:$0xff]
    %v58 = vld [vmem:[%s0] sm:$0xff]
    %v59 = vpack.c.bf16 %v58, %v58
    %v60 = vpack.c.bf16 %v56, %v56
    %v61 = vld [vmem:[#allocation2] sm:$0xff]
    %v62 = vld [vmem:[#allocation2 + $0x8] sm:$0xff]
    %v63 = vld [vmem:[#allocation2 + $0x10] sm:$0xff]
    %v64 = vld [vmem:[#allocation2 + $0x18] sm:$0xff]
    %v65 = vld [vmem:[#allocation2 + $0x20] sm:$0xff]
    %v66 = vld [vmem:[#allocation2 + $0x28] sm:$0xff]
    %v67 = vld [vmem:[#allocation2 + $0x30] sm:$0xff]
    %v68 = vld [vmem:[#allocation2 + $0x38] sm:$0xff]
    %v69 = vld [vmem:[#allocation2 + $0x40] sm:$0xff]
    %v70 = vld [vmem:[#allocation2 + $0x48] sm:$0xff]
    %v71 = vld [vmem:[#allocation2 + $0x50] sm:$0xff]
    %v72 = vld [vmem:[#allocation2 + $0x58] sm:$0xff]
    %v73 = vld [vmem:[#allocation2 + $0x60] sm:$0xff]
    %v74 = vld [vmem:[#allocation2 + $0x68] sm:$0xff]
    %v75 = vld [vmem:[#allocation2 + $0x70] sm:$0xff]
    %v76 = vld [vmem:[#allocation2 + $0x78] sm:$0xff]
    %v77 = vld [vmem:[%s4] sm:$0x3]
    %v79 = vlaneseq
    %v80 = vshrl.u32 %v79, 7
    %v81 = vsub.s32 0, %v80
    %v82 = vrot.slane %v77, %v81
    %v83 = vlaneseq
    %v84 = vshrl.u32 %v83, 7
    %v85 = vsub.s32 1, %v84
    %v86 = vrot.slane %v77, %v85
    %v105 = vunpack.c.l.b16 %v61
    %v106 = vunpack.c.h.b16 %v61
    %v107 = vunpack.c.l.b16 %v62
    %v108 = vunpack.c.h.b16 %v62
    %v109 = vunpack.c.l.b16 %v63
    %v110 = vunpack.c.h.b16 %v63
    %v111 = vunpack.c.l.b16 %v64
    %v112 = vunpack.c.h.b16 %v64
    %v113 = vunpack.c.l.b16 %v65
    %v114 = vunpack.c.h.b16 %v65
    %v115 = vunpack.c.l.b16 %v66
    %v116 = vunpack.c.h.b16 %v66
    %v117 = vunpack.c.l.b16 %v67
    %v118 = vunpack.c.h.b16 %v67
    %v119 = vunpack.c.l.b16 %v68
    %v120 = vunpack.c.h.b16 %v68
    %v121 = vunpack.c.l.b16 %v69
    %v122 = vunpack.c.h.b16 %v69
    %v123 = vunpack.c.l.b16 %v70
    %v124 = vunpack.c.h.b16 %v70
    %v125 = vunpack.c.l.b16 %v71
    %v126 = vunpack.c.h.b16 %v71
    %v127 = vunpack.c.l.b16 %v72
    %v128 = vunpack.c.h.b16 %v72
    %v129 = vunpack.c.l.b16 %v73
    %v130 = vunpack.c.h.b16 %v73
    %v131 = vunpack.c.l.b16 %v74
    %v132 = vunpack.c.h.b16 %v74
    %v133 = vunpack.c.l.b16 %v75
    %v134 = vunpack.c.h.b16 %v75
    %v135 = vunpack.c.l.b16 %v76
    %v136 = vunpack.c.h.b16 %v76
    %v137 = vpack.c.b16 %v107, %v105
    %v138 = vpack.c.b16 %v108, %v106
    %v139 = vpack.c.b16 %v111, %v109
    %v140 = vpack.c.b16 %v112, %v110
    %v141 = vpack.c.b16 %v115, %v113
    %v142 = vpack.c.b16 %v116, %v114
    %v143 = vpack.c.b16 %v119, %v117
    %v144 = vpack.c.b16 %v120, %v118
    %v145 = vpack.c.b16 %v123, %v121
    %v146 = vpack.c.b16 %v124, %v122
    %v147 = vpack.c.b16 %v127, %v125
    %v148 = vpack.c.b16 %v128, %v126
    %v149 = vpack.c.b16 %v131, %v129
    %v150 = vpack.c.b16 %v132, %v130
    %v151 = vpack.c.b16 %v135, %v133
    %v152 = vpack.c.b16 %v136, %v134
    %169 = vmatprep.subr.bf16.mxu0 %v138
    %170 = vmatpush1.bf16.msra.mxu0 %v137
    %171 = vmatprep.subr.bf16.mxu0 %v140
    %172 = vmatpush1.bf16.msra.mxu0 %v139
    %173 = vmatprep.subr.bf16.mxu0 %v142
    %174 = vmatpush1.bf16.msra.mxu0 %v141
    %175 = vmatprep.subr.bf16.mxu0 %v144
    %176 = vmatpush1.bf16.msra.mxu0 %v143
    %177 = vmatprep.subr.bf16.mxu0 %v146
    %178 = vmatpush1.bf16.msra.mxu0 %v145
    %179 = vmatprep.subr.bf16.mxu0 %v148
    %180 = vmatpush1.bf16.msra.mxu0 %v147
    %181 = vmatprep.subr.bf16.mxu0 %v150
    %182 = vmatpush1.bf16.msra.mxu0 %v149
    %183 = vmatprep.subr.bf16.mxu0 %v152
    %184 = vmatpush1.bf16.msra.mxu0 %v151
    %185 = vmatprep.subr.bf16.mxu0 0
    %186 = vmatpush1.bf16.msra.mxu0 0
    %187 = vmatprep.subr.bf16.mxu0 0
    %188 = vmatpush1.bf16.msra.mxu0 0
    %189 = vmatprep.subr.bf16.mxu0 0
    %190 = vmatpush1.bf16.msra.mxu0 0
    %191 = vmatprep.subr.bf16.mxu0 0
    %192 = vmatpush1.bf16.msra.mxu0 0
    %193 = vmatprep.subr.bf16.mxu0 0
    %194 = vmatpush1.bf16.msra.mxu0 0
    %195 = vmatprep.subr.bf16.mxu0 0
    %196 = vmatpush1.bf16.msra.mxu0 0
    %197 = vmatprep.subr.bf16.mxu0 0
    %198 = vmatpush1.bf16.msra.mxu0 0
    %199 = vmatprep.subr.bf16.mxu0 0
    %200 = vmatpush1.bf16.msra.mxu0 0
    %201 = vmatprep.mubr.bf16.mxu0 0
    %202 = vmatmul.mubr.bf16.gmra.mrb[0].mxu0 %v59
    %v203 = vpop.f32.mrb[0].mxu0
    %v204 = vadd.f32 %v82, %v203
    %v205 = vpop.f32.mrb[0].mxu0
    %v206 = vadd.f32 %v86, %v205
    %v207 = vpop.f32.mrb[0].mxu0
    %v208 = vpop.f32.mrb[0].mxu0
    %209 = vdwg.mxu0
    %v210 = vld [vmem:[#allocation5] sm:$0xff]
    %v211 = vld [vmem:[#allocation5 + $0x8] sm:$0xff]
    %v212 = vld [vmem:[#allocation5 + $0x10] sm:$0xff]
    %v213 = vld [vmem:[#allocation5 + $0x18] sm:$0xff]
    %v214 = vld [vmem:[#allocation5 + $0x20] sm:$0xff]
    %v215 = vld [vmem:[#allocation5 + $0x28] sm:$0xff]
    %v216 = vld [vmem:[#allocation5 + $0x30] sm:$0xff]
    %v217 = vld [vmem:[#allocation5 + $0x38] sm:$0xff]
    %v218 = vld [vmem:[#allocation5 + $0x40] sm:$0xff]
    %v219 = vld [vmem:[#allocation5 + $0x48] sm:$0xff]
    %v220 = vld [vmem:[#allocation5 + $0x50] sm:$0xff]
    %v221 = vld [vmem:[#allocation5 + $0x58] sm:$0xff]
    %v222 = vld [vmem:[#allocation5 + $0x60] sm:$0xff]
    %v223 = vld [vmem:[#allocation5 + $0x68] sm:$0xff]
    %v224 = vld [vmem:[#allocation5 + $0x70] sm:$0xff]
    %v225 = vld [vmem:[#allocation5 + $0x78] sm:$0xff]
    %v242 = vunpack.c.l.b16 %v210
    %v243 = vunpack.c.h.b16 %v210
    %v244 = vunpack.c.l.b16 %v211
    %v245 = vunpack.c.h.b16 %v211
    %v246 = vunpack.c.l.b16 %v212
    %v247 = vunpack.c.h.b16 %v212
    %v248 = vunpack.c.l.b16 %v213
    %v249 = vunpack.c.h.b16 %v213
    %v250 = vunpack.c.l.b16 %v214
    %v251 = vunpack.c.h.b16 %v214
    %v252 = vunpack.c.l.b16 %v215
    %v253 = vunpack.c.h.b16 %v215
    %v254 = vunpack.c.l.b16 %v216
    %v255 = vunpack.c.h.b16 %v216
    %v256 = vunpack.c.l.b16 %v217
    %v257 = vunpack.c.h.b16 %v217
    %v258 = vunpack.c.l.b16 %v218
    %v259 = vunpack.c.h.b16 %v218
    %v260 = vunpack.c.l.b16 %v219
    %v261 = vunpack.c.h.b16 %v219
    %v262 = vunpack.c.l.b16 %v220
    %v263 = vunpack.c.h.b16 %v220
    %v264 = vunpack.c.l.b16 %v221
    %v265 = vunpack.c.h.b16 %v221
    %v266 = vunpack.c.l.b16 %v222
    %v267 = vunpack.c.h.b16 %v222
    %v268 = vunpack.c.l.b16 %v223
    %v269 = vunpack.c.h.b16 %v223
    %v270 = vunpack.c.l.b16 %v224
    %v271 = vunpack.c.h.b16 %v224
    %v272 = vunpack.c.l.b16 %v225
    %v273 = vunpack.c.h.b16 %v225
    %v274 = vpack.c.b16 %v244, %v242
    %v275 = vpack.c.b16 %v245, %v243
    %v276 = vpack.c.b16 %v248, %v246
    %v277 = vpack.c.b16 %v249, %v247
    %v278 = vpack.c.b16 %v252, %v250
    %v279 = vpack.c.b16 %v253, %v251
    %v280 = vpack.c.b16 %v256, %v254
    %v281 = vpack.c.b16 %v257, %v255
    %v282 = vpack.c.b16 %v260, %v258
    %v283 = vpack.c.b16 %v261, %v259
    %v284 = vpack.c.b16 %v264, %v262
    %v285 = vpack.c.b16 %v265, %v263
    %v286 = vpack.c.b16 %v268, %v266
    %v287 = vpack.c.b16 %v269, %v267
    %v288 = vpack.c.b16 %v272, %v270
    %v289 = vpack.c.b16 %v273, %v271
    %306 = vmatprep.subr.bf16.mxu0 %v275
    %307 = vmatpush1.bf16.msra.mxu0 %v274
    %308 = vmatprep.subr.bf16.mxu0 %v277
    %309 = vmatpush1.bf16.msra.mxu0 %v276
    %310 = vmatprep.subr.bf16.mxu0 %v279
    %311 = vmatpush1.bf16.msra.mxu0 %v278
    %312 = vmatprep.subr.bf16.mxu0 %v281
    %313 = vmatpush1.bf16.msra.mxu0 %v280
    %314 = vmatprep.subr.bf16.mxu0 %v283
    %315 = vmatpush1.bf16.msra.mxu0 %v282
    %316 = vmatprep.subr.bf16.mxu0 %v285
    %317 = vmatpush1.bf16.msra.mxu0 %v284
    %318 = vmatprep.subr.bf16.mxu0 %v287
    %319 = vmatpush1.bf16.msra.mxu0 %v286
    %320 = vmatprep.subr.bf16.mxu0 %v289
    %321 = vmatpush1.bf16.msra.mxu0 %v288
    %322 = vmatprep.subr.bf16.mxu0 0
    %323 = vmatpush1.bf16.msra.mxu0 0
    %324 = vmatprep.subr.bf16.mxu0 0
    %325 = vmatpush1.bf16.msra.mxu0 0
    %326 = vmatprep.subr.bf16.mxu0 0
    %327 = vmatpush1.bf16.msra.mxu0 0
    %328 = vmatprep.subr.bf16.mxu0 0
    %329 = vmatpush1.bf16.msra.mxu0 0
    %330 = vmatprep.subr.bf16.mxu0 0
    %331 = vmatpush1.bf16.msra.mxu0 0
    %332 = vmatprep.subr.bf16.mxu0 0
    %333 = vmatpush1.bf16.msra.mxu0 0
    %334 = vmatprep.subr.bf16.mxu0 0
    %335 = vmatpush1.bf16.msra.mxu0 0
    %336 = vmatprep.subr.bf16.mxu0 0
    %337 = vmatpush1.bf16.msra.mxu0 0
    %338 = vmatprep.mubr.bf16.mxu0 0
    %339 = vmatmul.mubr.bf16.gmra.mrb[0].mxu0 %v60
    %v340 = vpop.f32.mrb[0].mxu0
    %v341 = vadd.f32 0.0, %v340
    %v342 = vpop.f32.mrb[0].mxu0
    %v343 = vadd.f32 0.0, %v342
    %v344 = vpop.f32.mrb[0].mxu0
    %v345 = vpop.f32.mrb[0].mxu0
    %346 = vdwg.mxu0
    %v347 = vadd.f32 %v204, %v341
    %v348 = vmul.f32 %v347, 0.5
    %v349 = vtanh.pop %v348
    %v350 = vadd.f32 %v349, 1.0
    %v351 = vmul.f32 %v350, 0.5
    %v352 = vld [vmem:[%s6] sm:$0x1]
    %v354 = vlaneseq
    %v355 = vshrl.u32 %v354, 7
    %v356 = vsub.s32 0, %v355
    %v357 = vrot.slane %v352, %v356
    %v359 = vadd.f32 %v343, %v357
    %v360 = vmul.f32 %v351, %v359
    %v361 = vadd.f32 %v206, %v360
    %v362 = vtanh.pop %v361
    %v363 = vsub.f32 %v362, %v56
    %365 = vset.pattern.permute.xlu0 0
    %366 = vperm.xlu0 %365, %v57
    %v367 = vpop.permute.xlu0 %366
    %v369 = vmul.f32 %v367, %v363
    %v370 = vadd.f32 %v56, %v369
    %371 = vst [vmem:[#allocation7] sm:$0xff] %v370
    // Predicated region
    $region38: #{attn_gru_cell.1} parent=1 // pred_check
      _
    $region39: #{attn_gru_cell.1} parent=1 // pred_check_branch
      %373 = sbr.rel (0) target = $region41
    $region40: #{attn_gru_cell.1} parent=1 // pred_region
      %s375 = ssub.s32 128, 128
      %376 = vsyncadd [#allocation4], %s375
      %s378 = sshll.u32 [#allocation7], 4
      %s379 = int_to_ptr.vmem [resolvable:$true] %s378
      %381 = dma.vmem_to_hbm [thread:$0]  %s379, 128, %s7, [#allocation4]
    $region41: #{attn_gru_cell.1} parent=1 // pred_fallthru
      _
    // Predicated region
    $region42: #{attn_gru_cell.1} parent=1 // pred_check
      _
    $region43: #{attn_gru_cell.1} parent=1 // pred_check_branch
      %383 = sbr.rel (0) target = $region45
    $region44: #{attn_gru_cell.1} parent=1 // pred_region
      %384 = dma.done [#allocation4], 128
    $region45: #{attn_gru_cell.1} parent=1 // pred_fallthru
      _
    %385 = vsyncpa [#allocation3], 1
    %386 = vsyncpa [#allocation6], 1
    %387 = vsyncpa [#allocation4], 1

</llo_original>
